<compile_context>
chip_gen: v6e
topology: v6e:2x2x1
jax: 0.10.0
libtpu: 0.0.40
codegen_flags: <defaults>
</compile_context>

<pallas_src>
import numpy as np
import jax
import jax.numpy as jnp
from jax.experimental import pallas as pl
from jax.experimental.pallas import tpu as pltpu


def _round_up(x, m):
    return ((x + m - 1) // m) * m


# ----------------------------------------------------------------------------
# Pallas kernel: one TILE_PC-wide slab of (episode, class) prototypes per step.
# ----------------------------------------------------------------------------
def _ncm_kernel(sup_ref, qry_ref, qsq_ref, inv_ref, wt_ref, sim_ref):
    sup = sup_ref[...]                     # [N_s, D]   (compute dtype, resident)
    qry = qry_ref[...]                     # [N_q, D]   (compute dtype, resident)
    wt = wt_ref[...]                       # [T, N_s]   0/1 indicator (streamed)

    # Class prototypes: (sum of selected supports) * exact f32 1/count == mean.
    proto = jnp.dot(wt, sup, preferred_element_type=jnp.float32)        # [T, D] f32
    proto = proto * inv_ref[...]                                        # [T, D]

    # Raw dot products; episode*class axis is lane-dense on the output.
    sim_raw = jax.lax.dot_general(
        qry, proto.astype(qry.dtype), (((1,), (1,)), ((), ())),
        preferred_element_type=jnp.float32)                             # [N_q, T]

    # |p|^2 as a lane-major row vector via a tiny MXU contraction (no transpose).
    proto2 = proto * proto
    psq_row = jax.lax.dot_general(
        jnp.ones((1, proto2.shape[1]), jnp.float32), proto2,
        (((1,), (1,)), ((), ())), preferred_element_type=jnp.float32)   # [1, T]

    # cosine = w12 * rsqrt(max(w1 * w2, eps^2))  (matches F.cosine_similarity)
    eps = jnp.float32(1e-8)
    denom_sq = qsq_ref[...] * psq_row                                   # [N_q, T]
    sim_ref[...] = sim_raw * jax.lax.rsqrt(jnp.maximum(denom_sq, eps * eps))


def ncm_similarity(support_features, query_features, class_indicators, inv_counts,
                   *, compute_dtype=jnp.bfloat16):
    """support [N_s, D], query [N_q, D], class_indicators [PC, N_s] (0/1),
    inv_counts [PC] -> cosine similarities [N_q, PC] (float32)."""
    N_s, D = support_features.shape
    N_q = query_features.shape[0]
    PC = class_indicators.shape[0]

    D_pad = _round_up(D, 128)
    N_s_pad = _round_up(N_s, 128)          # lanes of indicator, sublanes of support
    N_q_pad = _round_up(N_q, 8)
    PC_pad = _round_up(PC, 128)

    # Largest tile in {512, 384, 256, 128} that divides the padded episode axis.
    TILE_PC = 128
    for cand in (512, 384, 256):
        if PC_pad % cand == 0:
            TILE_PC = cand
            break

    sup_p = jnp.pad(support_features.astype(compute_dtype),
                    ((0, N_s_pad - N_s), (0, D_pad - D)))
    qry_p = jnp.pad(query_features.astype(compute_dtype),
                    ((0, N_q_pad - N_q), (0, D_pad - D)))
    wt_p = jnp.pad(class_indicators.astype(compute_dtype),
                   ((0, PC_pad - PC), (0, N_s_pad - N_s)))
    inv_p = jnp.pad(inv_counts.astype(jnp.float32).reshape(-1, 1),
                    ((0, PC_pad - PC), (0, 0)))
    # Query squared norms: hoisted out of the grid, computed once in the wrapper.
    qsq = jnp.sum(qry_p.astype(jnp.float32) ** 2, axis=1, keepdims=True)  # [N_q_pad,1]

    sim = pl.pallas_call(
        _ncm_kernel,
        out_shape=jax.ShapeDtypeStruct((N_q_pad, PC_pad), jnp.float32),
        grid=(PC_pad // TILE_PC,),
        in_specs=[
            pl.BlockSpec((N_s_pad, D_pad), lambda i: (0, 0)),    # support (resident)
            pl.BlockSpec((N_q_pad, D_pad), lambda i: (0, 0)),    # query   (resident)
            pl.BlockSpec((N_q_pad, 1), lambda i: (0, 0)),        # |q|^2   (resident)
            pl.BlockSpec((TILE_PC, 1), lambda i: (i, 0)),        # exact 1/count
            pl.BlockSpec((TILE_PC, N_s_pad), lambda i: (i, 0)),  # 0/1 indicators
        ],
        out_specs=pl.BlockSpec((N_q_pad, TILE_PC), lambda i: (0, i)),
        compiler_params=pltpu.CompilerParams(
            dimension_semantics=("parallel",)),
    )(sup_p, qry_p, qsq, inv_p, wt_p)
    return sim[:N_q, :PC]


# ----------------------------------------------------------------------------
# NCM module (host-side glue mirrors the PyTorch forward semantics).
# ----------------------------------------------------------------------------
class NCM:
    def __init__(self, mode, shots, seed=-1, use_bf16=True):
        self.seed = seed
        assert mode.lower() in ['sum', 'max', 'mean']
        self.mode = mode.lower()
        assert isinstance(shots, int) and shots > 0
        self.shots = shots
        # bf16 operands (f32 accumulation) for the MXU path; set False for
        # near-bit-parity with the f32 PyTorch reference.
        self.compute_dtype = jnp.bfloat16 if use_bf16 else jnp.float32

    def forward(self, support_features, query_features, support_labels, query_labels):
        # ---- label bookkeeping (identical structure to the reference) ----
        unique_labels = []
        unique_support_labels = {}
        unique_query_labels_reverse = {}
        annotations = {'support': {}, 'query': {}}
        for i, (class_index, image_index) in enumerate(support_labels):
            if class_index not in unique_labels:
                unique_labels.append(class_index)
            unique_support_labels.setdefault(class_index, [])
            if image_index not in unique_support_labels[class_index]:
                unique_support_labels[class_index].append(image_index)
            annotations['support'].setdefault(image_index, []).append(i)
        for i, (class_index, image_index) in enumerate(query_labels):
            if image_index not in unique_query_labels_reverse:
                unique_query_labels_reverse[image_index] = class_index
            annotations['query'].setdefault(image_index, []).append(i)

        n_support = support_features.shape[0]
        n_classes = len(unique_labels)

        # ---- per-(episode, class) 0/1 indicator rows + exact 1/count scales ----
        rows, inv_counts, row_meta = [], [], []
        for image_index in annotations['query']:
            for n_shot in range(self.shots):
                sampled = {}
                for cls in unique_labels:
                    if self.seed > 0:
                        np.random.seed(self.seed)
                    sampled[cls] = np.random.choice(
                        unique_support_labels[cls], n_shot + 1, replace=False)
                for cls in unique_labels:
                    idxs = []
                    for idx in sampled[cls]:
                        idxs.extend(annotations['support'][idx])
                    row = np.zeros(n_support, dtype=np.float32)
                    row[idxs] = 1.0
                    rows.append(row)
                    inv_counts.append(1.0 / len(idxs))
                row_meta.append((image_index, n_shot))
        class_indicators = jnp.asarray(np.stack(rows))                  # [P*C, N_s]
        inv_counts = jnp.asarray(np.asarray(inv_counts, np.float32))    # [P*C]

        # ---- hot path: one fused Pallas call over ALL episodes ----
        sim_dev = ncm_similarity(support_features, query_features,
                                 class_indicators, inv_counts,
                                 compute_dtype=self.compute_dtype)
        sim_flat = np.asarray(jax.block_until_ready(sim_dev))           # [N_q, P*C]
        P = len(row_meta)
        sim_all = sim_flat.reshape(sim_flat.shape[0], P, n_classes)     # [N_q, P, C]

        # ---- per-image aggregation + accuracy (tiny host-side dict logic) ----
        acc = np.zeros(self.shots)
        for p, (image_index, n_shot) in enumerate(row_meta):
            aug_q = annotations['query'][image_index]
            sim = sim_all[aug_q, p, :]                                  # [M, C]
            max_similarity = sim.max(axis=1)
            max_similarity_index = sim.argmax(axis=1)
            if self.mode == 'max':
                best = int(np.argmax(max_similarity))                   # first max (strict > in ref)
                support_class = unique_labels[int(max_similarity_index[best])]
            else:
                class_similarity = {}
                for i in range(len(max_similarity)):
                    cls = unique_labels[int(max_similarity_index[i])]
                    class_similarity.setdefault(cls, []).append(max_similarity[i])
                for cls in class_similarity:
                    vals = np.stack(class_similarity[cls])
                    class_similarity[cls] = vals.sum() if self.mode == 'sum' else vals.mean()
                support_class = max(class_similarity, key=class_similarity.get)
            if support_class == unique_query_labels_reverse[image_index]:
                acc[n_shot] += 1
        acc = acc / len(annotations['query'])
        return acc


# ----------------------------------------------------------------------------
if __name__ == "__main__":
    key = jax.random.PRNGKey(0)
    n_classes = 5
    sup_imgs_per_class = 4
    sup_augs = 2
    n_query_images = 8
    qry_augs = 2
    D = 32
    shots = 2

    # class-dependent centers so the task is non-trivial
    kc, ks, kq = jax.random.split(key, 3)
    centers = jax.random.normal(kc, (n_classes, D), dtype=jnp.float32)

    support_labels, sup_cls = [], []
    img_id = 0
    for c in range(n_classes):
        for _ in range(sup_imgs_per_class):
            for _ in range(sup_augs):
                support_labels.append((c, img_id))
                sup_cls.append(c)
            img_id += 1
    query_labels, qry_cls = [], []
    for q in range(n_query_images):
        c = q % n_classes
        for _ in range(qry_augs):
            query_labels.append((c, 1000 + q))
            qry_cls.append(c)

    N_s, N_q = len(support_labels), len(query_labels)
    support_features = centers[jnp.asarray(sup_cls)] * 2.0 + \
        0.5 * jax.random.normal(ks, (N_s, D), dtype=jnp.float32)
    query_features = centers[jnp.asarray(qry_cls)] * 2.0 + \
        0.5 * jax.random.normal(kq, (N_q, D), dtype=jnp.float32)

    # ---- quick numerical check of the fused kernel vs. a NumPy reference ----
    rng = np.random.default_rng(0)
    ind = (rng.random((12, N_s)) < 0.3).astype(np.float32)
    ind[ind.sum(axis=1) == 0, 0] = 1.0
    inv = (1.0 / ind.sum(axis=1)).astype(np.float32)
    sim_k = np.asarray(jax.block_until_ready(
        ncm_similarity(support_features, query_features,
                       jnp.asarray(ind), jnp.asarray(inv))))
    sf = np.asarray(support_features, np.float64)
    qf = np.asarray(query_features, np.float64)
    proto = (ind.astype(np.float64) @ sf) * inv[:, None]
    num = qf @ proto.T
    den = np.maximum(np.linalg.norm(qf, axis=1, keepdims=True)
                     * np.linalg.norm(proto, axis=1)[None, :], 1e-8)
    assert np.max(np.abs(sim_k - num / den)) < 3e-2, "kernel similarity mismatch"

    model = NCM(mode='mean', shots=shots, seed=1)
    acc = model.forward(support_features, query_features, support_labels, query_labels)
    assert acc.shape == (shots,)
    # TODO(synk): the reference reads `cfg.sampler.n_shots` (undefined global); self.shots is used here.
    print("KERNEL_OK")
</pallas_src>

<mosaic_0001>
module attributes {stable_mosaic.version = 11 : i64} {
  func.func @_ncm_kernel(%arg0: i32, %arg1: memref<128x128xbf16, #tpu.memory_space<vmem>>, %arg2: memref<16x128xbf16, #tpu.memory_space<vmem>>, %arg3: memref<16x1xf32, #tpu.memory_space<vmem>>, %arg4: memref<128x1xf32, #tpu.memory_space<vmem>>, %arg5: memref<128x128xbf16, #tpu.memory_space<vmem>>, %arg6: memref<16x128xf32, #tpu.memory_space<vmem>>) attributes {dimension_semantics = [#tpu.dimension_semantics<parallel>], iteration_bounds = array<i64: 1>, scalar_prefetch = 0 : i64, scratch_operands = 0 : i64, tpu.core_type = #tpu.core_type<tc>, window_params = [{pipeline_mode = #tpu.pipeline_mode<synchronous>, transform_indices = @transform_0, window_bounds = array<i64: 128, 128>}, {pipeline_mode = #tpu.pipeline_mode<synchronous>, transform_indices = @transform_1, window_bounds = array<i64: 16, 128>}, {pipeline_mode = #tpu.pipeline_mode<synchronous>, transform_indices = @transform_2, window_bounds = array<i64: 16, 1>}, {transform_indices = @transform_3, window_bounds = array<i64: 128, 1>}, {transform_indices = @transform_4, window_bounds = array<i64: 128, 128>}, {transform_indices = @transform_5, window_bounds = array<i64: 16, 128>}]} {
    %c0 = arith.constant 0 : index
    %c0_0 = arith.constant 0 : index
    %0 = vector.load %arg1[%c0, %c0_0] : memref<128x128xbf16, #tpu.memory_space<vmem>>, vector<128x128xbf16>
    %c0_1 = arith.constant 0 : index
    %c0_2 = arith.constant 0 : index
    %1 = vector.load %arg2[%c0_1, %c0_2] : memref<16x128xbf16, #tpu.memory_space<vmem>>, vector<16x128xbf16>
    %c0_3 = arith.constant 0 : index
    %c0_4 = arith.constant 0 : index
    %2 = vector.load %arg5[%c0_3, %c0_4] : memref<128x128xbf16, #tpu.memory_space<vmem>>, vector<128x128xbf16>
    %cst = arith.constant dense<0.000000e+00> : vector<128x128xf32>
    %3 = tpu.matmul %2, %0, %cst {dimension_numbers = #tpu.dot_dimension_numbers<[1], [0], [0], [1], [0, 0, 1, 1], [], []>} : vector<128x128xbf16>, vector<128x128xbf16>, vector<128x128xf32> -> vector<128x128xf32>
    %c0_5 = arith.constant 0 : index
    %c0_6 = arith.constant 0 : index
    %4 = vector.load %arg4[%c0_5, %c0_6] : memref<128x1xf32, #tpu.memory_space<vmem>>, vector<128x1xf32>
    %5 = vector.broadcast %4 : vector<128x1xf32> to vector<128x128xf32>
    %6 = arith.mulf %3, %5 : vector<128x128xf32>
    %7 = arith.truncf %6 : vector<128x128xf32> to vector<128x128xbf16>
    %cst_7 = arith.constant dense<0.000000e+00> : vector<16x128xf32>
    %8 = tpu.matmul %1, %7, %cst_7 {dimension_numbers = #tpu.dot_dimension_numbers<[1], [1], [0], [0], [0, 0, 1, 0], [], []>} : vector<16x128xbf16>, vector<128x128xbf16>, vector<16x128xf32> -> vector<16x128xf32>
    %9 = arith.mulf %6, %6 : vector<128x128xf32>
    %cst_8 = arith.constant 1.000000e+00 : f32
    %10 = vector.broadcast %cst_8 : f32 to vector<1x128xf32>
    %cst_9 = arith.constant dense<0.000000e+00> : vector<1x128xf32>
    %11 = tpu.matmul %10, %9, %cst_9 {dimension_numbers = #tpu.dot_dimension_numbers<[1], [1], [0], [0], [0, 0, 1, 0], [], []>} : vector<1x128xf32>, vector<128x128xf32>, vector<1x128xf32> -> vector<1x128xf32>
    %c0_10 = arith.constant 0 : index
    %c0_11 = arith.constant 0 : index
    %12 = vector.load %arg3[%c0_10, %c0_11] : memref<16x1xf32, #tpu.memory_space<vmem>>, vector<16x1xf32>
    %13 = vector.broadcast %12 : vector<16x1xf32> to vector<16x128xf32>
    %14 = vector.broadcast %11 : vector<1x128xf32> to vector<16x128xf32>
    %15 = arith.mulf %13, %14 : vector<16x128xf32>
    %cst_12 = arith.constant 9.99999993E-9 : f32
    %cst_13 = arith.constant 9.99999993E-9 : f32
    %16 = arith.mulf %cst_12, %cst_13 : f32
    %17 = vector.broadcast %16 : f32 to vector<16x128xf32>
    %18 = arith.maximumf %15, %17 : vector<16x128xf32>
    %19 = math.rsqrt %18 : vector<16x128xf32>
    %20 = arith.mulf %8, %19 : vector<16x128xf32>
    %c0_14 = arith.constant 0 : index
    %c0_15 = arith.constant 0 : index
    %21 = vector.load %arg6[%c0_14, %c0_15] : memref<16x128xf32, #tpu.memory_space<vmem>>, vector<16x128xf32>
    tpu.vector_store %arg6[%c0_14, %c0_15], %20 {strides = array<i32>} : memref<16x128xf32, #tpu.memory_space<vmem>>, vector<16x128xf32>,
    return
  }
  func.func @transform_0(%arg0: i32) -> (i32, i32) {
    %c0_i32 = arith.constant 0 : i32
    %c0_i32_0 = arith.constant 0 : i32
    %c0_i32_1 = arith.constant 0 : i32
    return %c0_i32, %c0_i32_0 : i32, i32
  }
  func.func @transform_1(%arg0: i32) -> (i32, i32) {
    %c0_i32 = arith.constant 0 : i32
    %c0_i32_0 = arith.constant 0 : i32
    %c0_i32_1 = arith.constant 0 : i32
    return %c0_i32, %c0_i32_0 : i32, i32
  }
  func.func @transform_2(%arg0: i32) -> (i32, i32) {
    %c0_i32 = arith.constant 0 : i32
    %c0_i32_0 = arith.constant 0 : i32
    %c0_i32_1 = arith.constant 0 : i32
    return %c0_i32, %c0_i32_0 : i32, i32
  }
  func.func @transform_3(%arg0: i32) -> (i32, i32) {
    %c0_i32 = arith.constant 0 : i32
    %c0_i32_0 = arith.constant 0 : i32
    return %arg0, %c0_i32 : i32, i32
  }
  func.func @transform_4(%arg0: i32) -> (i32, i32) {
    %c0_i32 = arith.constant 0 : i32
    %c0_i32_0 = arith.constant 0 : i32
    return %arg0, %c0_i32 : i32, i32
  }
  func.func @transform_5(%arg0: i32) -> (i32, i32) {
    %c0_i32 = arith.constant 0 : i32
    %c0_i32_0 = arith.constant 0 : i32
    return %c0_i32, %arg0 : i32, i32
  }
}

</mosaic_0001>

<llo_original>
// kernel: tpu_custom_call.1
$region0: #{tpu_custom_call.1}
  #allocation0 [shape = 'u32[]', space=smem, size = 0x4, offset = 0x4, fixed_abs, tag = 'smem constant byte address 0x4 - core index']
  #allocation1 [shape = 'u32[144,128]{1,0:T(1,128)}', space=vmem, size = 0x12000, scoped, tag = 'internal scratch']
  %s0 = inlined_call_operand.vmem [shape: bf16[128,128], index: 0, kind: input, shape index: {}]
  %s1 = inlined_call_operand.vmem [shape: bf16[16,128], index: 1, kind: input, shape index: {}]
  %s2 = inlined_call_operand.vmem [shape: f32[16,1], index: 2, kind: input, shape index: {}]
  %s3 = inlined_call_operand.vmem [shape: f32[128,1], index: 3, kind: input, shape index: {}]
  %s4 = inlined_call_operand.vmem [shape: bf16[128,128], index: 4, kind: input, shape index: {}]
  %s5 = inlined_call_operand.hbm [shape: f32[16,128], index: 5, kind: output, shape index: {}]
  %s6 = sld [smem:[#allocation0]]
  $region30: #{tpu_custom_call.1} parent=0
    _
  %s8 = ssub.s32 1, %s6
  %s9 = scalar_select 0, %s8, %s6
  $region1: #{tpu_custom_call.1} parent=0
    #allocation2 [shape = 'u8[8192]{0}', space=vmem, size = 0x2000, scoped, tag = 'output window, operand 0, single buffered']
    #allocation3 [shape = 's32[1]{0}', space=sflag, size = 0x4, scoped, tag = 'scoped memory for tpu_custom_call.1']
    %10 = vsyncpa [#allocation3], 0
    // Predicated region
    $region2: #{tpu_custom_call.1} parent=1 // pred_check
      _
    $region3: #{tpu_custom_call.1} parent=1 // pred_check_branch
      %12 = sbr.rel (0) target = $region5
    $region4: #{tpu_custom_call.1} parent=1 // pred_region
      _
    $region5: #{tpu_custom_call.1} parent=1 // pred_fallthru
      _
    // Predicated region
    $region6: #{tpu_custom_call.1} parent=1 // pred_check
      _
    $region7: #{tpu_custom_call.1} parent=1 // pred_check_branch
      %14 = sbr.rel (0) target = $region9
    $region8: #{tpu_custom_call.1} parent=1 // pred_region
      _
    $region9: #{tpu_custom_call.1} parent=1 // pred_fallthru
      _
    // Predicated region
    $region10: #{tpu_custom_call.1} parent=1 // pred_check
      _
    $region11: #{tpu_custom_call.1} parent=1 // pred_check_branch
      %16 = sbr.rel (0) target = $region13
    $region12: #{tpu_custom_call.1} parent=1 // pred_region
      _
    $region13: #{tpu_custom_call.1} parent=1 // pred_fallthru
      _
    // Predicated region
    $region14: #{tpu_custom_call.1} parent=1 // pred_check
      _
    $region15: #{tpu_custom_call.1} parent=1 // pred_check_branch
      %18 = sbr.rel (0) target = $region17
    $region16: #{tpu_custom_call.1} parent=1 // pred_region
      _
    $region17: #{tpu_custom_call.1} parent=1 // pred_fallthru
      _
    // Predicated region
    $region18: #{tpu_custom_call.1} parent=1 // pred_check
      _
    $region19: #{tpu_custom_call.1} parent=1 // pred_check_branch
      %20 = sbr.rel (0) target = $region21
    $region20: #{tpu_custom_call.1} parent=1 // pred_region
      _
    $region21: #{tpu_custom_call.1} parent=1 // pred_fallthru
      _
    %v22 = vld [vmem:[%s0] sm:$0xf]
    %v23 = vld [vmem:[%s0 + $0x4] sm:$0xf]
    %v24 = vld [vmem:[%s0 + $0x8] sm:$0xf]
    %v25 = vld [vmem:[%s0 + $0xc] sm:$0xf]
    %v26 = vld [vmem:[%s0 + $0x10] sm:$0xf]
    %v27 = vld [vmem:[%s0 + $0x14] sm:$0xf]
    %v28 = vld [vmem:[%s0 + $0x18] sm:$0xf]
    %v29 = vld [vmem:[%s0 + $0x1c] sm:$0xf]
    %v30 = vld [vmem:[%s0 + $0x20] sm:$0xf]
    %v31 = vld [vmem:[%s0 + $0x24] sm:$0xf]
    %v32 = vld [vmem:[%s0 + $0x28] sm:$0xf]
    %v33 = vld [vmem:[%s0 + $0x2c] sm:$0xf]
    %v34 = vld [vmem:[%s0 + $0x30] sm:$0xf]
    %v35 = vld [vmem:[%s0 + $0x34] sm:$0xf]
    %v36 = vld [vmem:[%s0 + $0x38] sm:$0xf]
    %v37 = vld [vmem:[%s0 + $0x3c] sm:$0xf]
    %v38 = vld [vmem:[%s1] sm:$0xf]
    %v39 = vld [vmem:[%s1 + $0x4] sm:$0xf]
    %v40 = vld [vmem:[%s4] sm:$0xf]
    %v41 = vld [vmem:[%s4 + $0x4] sm:$0xf]
    %v42 = vld [vmem:[%s4 + $0x8] sm:$0xf]
    %v43 = vld [vmem:[%s4 + $0xc] sm:$0xf]
    %v44 = vld [vmem:[%s4 + $0x10] sm:$0xf]
    %v45 = vld [vmem:[%s4 + $0x14] sm:$0xf]
    %v46 = vld [vmem:[%s4 + $0x18] sm:$0xf]
    %v47 = vld [vmem:[%s4 + $0x1c] sm:$0xf]
    %v48 = vld [vmem:[%s4 + $0x20] sm:$0xf]
    %v49 = vld [vmem:[%s4 + $0x24] sm:$0xf]
    %v50 = vld [vmem:[%s4 + $0x28] sm:$0xf]
    %v51 = vld [vmem:[%s4 + $0x2c] sm:$0xf]
    %v52 = vld [vmem:[%s4 + $0x30] sm:$0xf]
    %v53 = vld [vmem:[%s4 + $0x34] sm:$0xf]
    %v54 = vld [vmem:[%s4 + $0x38] sm:$0xf]
    %v55 = vld [vmem:[%s4 + $0x3c] sm:$0xf]
    %v72 = vunpack.c.l.b16 %v40
    %v73 = vunpack.c.l.b16 %v41
    %v74 = vunpack.c.l.b16 %v42
    %v75 = vunpack.c.l.b16 %v43
    %v76 = vunpack.c.l.b16 %v44
    %v77 = vunpack.c.l.b16 %v45
    %v78 = vunpack.c.l.b16 %v46
    %v79 = vunpack.c.l.b16 %v47
    %v80 = vunpack.c.l.b16 %v48
    %v81 = vunpack.c.l.b16 %v49
    %v82 = vunpack.c.l.b16 %v50
    %v83 = vunpack.c.l.b16 %v51
    %v84 = vunpack.c.l.b16 %v52
    %v85 = vunpack.c.l.b16 %v53
    %v86 = vunpack.c.l.b16 %v54
    %v87 = vunpack.c.l.b16 %v55
    %v88 = vpack.c.b16 %v73, %v72
    %v89 = vpack.c.b16 %v75, %v74
    %v90 = vpack.c.b16 %v77, %v76
    %v91 = vpack.c.b16 %v79, %v78
    %v92 = vpack.c.b16 %v81, %v80
    %v93 = vpack.c.b16 %v83, %v82
    %v94 = vpack.c.b16 %v85, %v84
    %v95 = vpack.c.b16 %v87, %v86
    %v120 = vunpack.c.l.b16 %v22
    %v121 = vunpack.c.l.b16 %v23
    %v122 = vunpack.c.l.b16 %v24
    %v123 = vunpack.c.l.b16 %v25
    %v124 = vunpack.c.l.b16 %v26
    %v125 = vunpack.c.l.b16 %v27
    %v126 = vunpack.c.l.b16 %v28
    %v127 = vunpack.c.l.b16 %v29
    %v128 = vunpack.c.l.b16 %v30
    %v129 = vunpack.c.l.b16 %v31
    %v130 = vunpack.c.l.b16 %v32
    %v131 = vunpack.c.l.b16 %v33
    %v132 = vunpack.c.l.b16 %v34
    %v133 = vunpack.c.l.b16 %v35
    %v134 = vunpack.c.l.b16 %v36
    %v135 = vunpack.c.l.b16 %v37
    %v136 = vpack.c.b16 %v121, %v120
    %v137 = vpack.c.b16 %v123, %v122
    %v138 = vpack.c.b16 %v125, %v124
    %v139 = vpack.c.b16 %v127, %v126
    %v140 = vpack.c.b16 %v129, %v128
    %v141 = vpack.c.b16 %v131, %v130
    %v142 = vpack.c.b16 %v133, %v132
    %v143 = vpack.c.b16 %v135, %v134
    %152 = vmatprep.subr.bf16.mxu0 0
    %153 = vmatpush1.bf16.msra.mxu0 %v143
    %154 = vmatprep.subr.bf16.mxu0 0
    %155 = vmatpush1.bf16.msra.mxu0 %v142
    %156 = vmatprep.subr.bf16.mxu0 0
    %157 = vmatpush1.bf16.msra.mxu0 %v141
    %158 = vmatprep.subr.bf16.mxu0 0
    %159 = vmatpush1.bf16.msra.mxu0 %v140
    %160 = vmatprep.subr.bf16.mxu0 0
    %161 = vmatpush1.bf16.msra.mxu0 %v139
    %162 = vmatprep.subr.bf16.mxu0 0
    %163 = vmatpush1.bf16.msra.mxu0 %v138
    %164 = vmatprep.subr.bf16.mxu0 0
    %165 = vmatpush1.bf16.msra.mxu0 %v137
    %166 = vmatprep.subr.bf16.mxu0 0
    %167 = vmatpush1.bf16.msra.mxu0 %v136
    %168 = vmatprep.subr.bf16.mxu0 0
    %169 = vmatpush2.bf16.msra.mxu0 0
    %170 = vmatprep.subr.bf16.mxu0 0
    %171 = vmatpush2.bf16.msra.mxu0 0
    %172 = vmatprep.subr.bf16.mxu0 0
    %173 = vmatpush2.bf16.msra.mxu0 0
    %174 = vmatprep.subr.bf16.mxu0 0
    %175 = vmatpush2.bf16.msra.mxu0 0
    %176 = vmatprep.subr.bf16.mxu0 0
    %177 = vmatpush2.bf16.msra.mxu0 0
    %178 = vmatprep.subr.bf16.mxu0 0
    %179 = vmatpush2.bf16.msra.mxu0 0
    %180 = vmatprep.subr.bf16.mxu0 0
    %181 = vmatpush2.bf16.msra.mxu0 0
    %182 = vmatprep.subr.bf16.mxu0 0
    %183 = vmatpush2.bf16.msra.mxu0 0
    %184 = vmatprep.mubr.bf16.mxu0 0
    %185 = vmatmul.mubr.bf16.gmra.mxu0 %v88
    %v186 = vpop.f32.mrf.mxu0
    %v187 = vadd.f32 0.0, %v186
    %v188 = vpop.f32.mrf.mxu0
    %v189 = vpop.f32.mrf.mxu0
    %v190 = vadd.f32 0.0, %v189
    %v191 = vpop.f32.mrf.mxu0
    %192 = vmatprep.mubr.bf16.mxu0 0
    %193 = vmatmul.mubr.bf16.gmra.mxu0 %v89
    %v194 = vpop.f32.mrf.mxu0
    %v195 = vadd.f32 0.0, %v194
    %v196 = vpop.f32.mrf.mxu0
    %v197 = vpop.f32.mrf.mxu0
    %v198 = vadd.f32 0.0, %v197
    %v199 = vpop.f32.mrf.mxu0
    %200 = vmatprep.mubr.bf16.mxu0 0
    %201 = vmatmul.mubr.bf16.gmra.mxu0 %v90
    %v202 = vpop.f32.mrf.mxu0
    %v203 = vadd.f32 0.0, %v202
    %v204 = vpop.f32.mrf.mxu0
    %v205 = vpop.f32.mrf.mxu0
    %v206 = vadd.f32 0.0, %v205
    %v207 = vpop.f32.mrf.mxu0
    %208 = vmatprep.mubr.bf16.mxu0 0
    %209 = vmatmul.mubr.bf16.gmra.mxu0 %v91
    %v210 = vpop.f32.mrf.mxu0
    %v211 = vadd.f32 0.0, %v210
    %v212 = vpop.f32.mrf.mxu0
    %v213 = vpop.f32.mrf.mxu0
    %v214 = vadd.f32 0.0, %v213
    %v215 = vpop.f32.mrf.mxu0
    %216 = vmatprep.mubr.bf16.mxu0 0
    %217 = vmatmul.mubr.bf16.gmra.mxu0 %v92
    %v218 = vpop.f32.mrf.mxu0
    %v219 = vadd.f32 0.0, %v218
    %v220 = vpop.f32.mrf.mxu0
    %v221 = vpop.f32.mrf.mxu0
    %v222 = vadd.f32 0.0, %v221
    %v223 = vpop.f32.mrf.mxu0
    %224 = vmatprep.mubr.bf16.mxu0 0
    %225 = vmatmul.mubr.bf16.gmra.mxu0 %v93
    %v226 = vpop.f32.mrf.mxu0
    %v227 = vadd.f32 0.0, %v226
    %v228 = vpop.f32.mrf.mxu0
    %v229 = vpop.f32.mrf.mxu0
    %v230 = vadd.f32 0.0, %v229
    %v231 = vpop.f32.mrf.mxu0
    %232 = vmatprep.mubr.bf16.mxu0 0
    %233 = vmatmul.mubr.bf16.gmra.mxu0 %v94
    %v234 = vpop.f32.mrf.mxu0
    %v235 = vadd.f32 0.0, %v234
    %v236 = vpop.f32.mrf.mxu0
    %v237 = vpop.f32.mrf.mxu0
    %v238 = vadd.f32 0.0, %v237
    %v239 = vpop.f32.mrf.mxu0
    %240 = vmatprep.mubr.bf16.mxu0 0
    %241 = vmatmul.mubr.bf16.gmra.mxu0 %v95
    %v242 = vpop.f32.mrf.mxu0
    %v243 = vadd.f32 0.0, %v242
    %v244 = vpop.f32.mrf.mxu0
    %v245 = vpop.f32.mrf.mxu0
    %v246 = vadd.f32 0.0, %v245
    %v247 = vpop.f32.mrf.mxu0
    %248 = vdwg.mxu0
    %v249 = vld [vmem:[%s3] sm:$0xff]
    %v250 = vld [vmem:[%s3 + $0x8] sm:$0xff]
    %v251 = vld [vmem:[%s3 + $0x10] sm:$0xff]
    %v252 = vld [vmem:[%s3 + $0x18] sm:$0xff]
    %v253 = vld [vmem:[%s3 + $0x20] sm:$0xff]
    %v254 = vld [vmem:[%s3 + $0x28] sm:$0xff]
    %v255 = vld [vmem:[%s3 + $0x30] sm:$0xff]
    %v256 = vld [vmem:[%s3 + $0x38] sm:$0xff]
    %v257 = vld [vmem:[%s3 + $0x40] sm:$0xff]
    %v258 = vld [vmem:[%s3 + $0x48] sm:$0xff]
    %v259 = vld [vmem:[%s3 + $0x50] sm:$0xff]
    %v260 = vld [vmem:[%s3 + $0x58] sm:$0xff]
    %v261 = vld [vmem:[%s3 + $0x60] sm:$0xff]
    %v262 = vld [vmem:[%s3 + $0x68] sm:$0xff]
    %v263 = vld [vmem:[%s3 + $0x70] sm:$0xff]
    %v264 = vld [vmem:[%s3 + $0x78] sm:$0xff]
    %266 = vset.pattern.permute.xlu0 0
    %267 = vperm.xlu0 %266, %v249
    %v268 = vpop.permute.xlu0 %267
    %271 = vset.pattern.permute.xlu0 0
    %272 = vperm.xlu0 %271, %v250
    %v273 = vpop.permute.xlu0 %272
    %276 = vset.pattern.permute.xlu0 0
    %277 = vperm.xlu0 %276, %v251
    %v278 = vpop.permute.xlu0 %277
    %281 = vset.pattern.permute.xlu0 0
    %282 = vperm.xlu0 %281, %v252
    %v283 = vpop.permute.xlu0 %282
    %286 = vset.pattern.permute.xlu0 0
    %287 = vperm.xlu0 %286, %v253
    %v288 = vpop.permute.xlu0 %287
    %291 = vset.pattern.permute.xlu0 0
    %292 = vperm.xlu0 %291, %v254
    %v293 = vpop.permute.xlu0 %292
    %296 = vset.pattern.permute.xlu0 0
    %297 = vperm.xlu0 %296, %v255
    %v298 = vpop.permute.xlu0 %297
    %301 = vset.pattern.permute.xlu0 0
    %302 = vperm.xlu0 %301, %v256
    %v303 = vpop.permute.xlu0 %302
    %306 = vset.pattern.permute.xlu0 0
    %307 = vperm.xlu0 %306, %v257
    %v308 = vpop.permute.xlu0 %307
    %311 = vset.pattern.permute.xlu0 0
    %312 = vperm.xlu0 %311, %v258
    %v313 = vpop.permute.xlu0 %312
    %316 = vset.pattern.permute.xlu0 0
    %317 = vperm.xlu0 %316, %v259
    %v318 = vpop.permute.xlu0 %317
    %321 = vset.pattern.permute.xlu0 0
    %322 = vperm.xlu0 %321, %v260
    %v323 = vpop.permute.xlu0 %322
    %326 = vset.pattern.permute.xlu0 0
    %327 = vperm.xlu0 %326, %v261
    %v328 = vpop.permute.xlu0 %327
    %331 = vset.pattern.permute.xlu0 0
    %332 = vperm.xlu0 %331, %v262
    %v333 = vpop.permute.xlu0 %332
    %336 = vset.pattern.permute.xlu0 0
    %337 = vperm.xlu0 %336, %v263
    %v338 = vpop.permute.xlu0 %337
    %341 = vset.pattern.permute.xlu0 0
    %342 = vperm.xlu0 %341, %v264
    %v343 = vpop.permute.xlu0 %342
    %v345 = vmul.f32 %v187, %v268
    %v346 = vmul.f32 %v190, %v273
    %v347 = vmul.f32 %v195, %v278
    %v348 = vmul.f32 %v198, %v283
    %v349 = vmul.f32 %v203, %v288
    %v350 = vmul.f32 %v206, %v293
    %v351 = vmul.f32 %v211, %v298
    %v352 = vmul.f32 %v214, %v303
    %v353 = vmul.f32 %v219, %v308
    %v354 = vmul.f32 %v222, %v313
    %v355 = vmul.f32 %v227, %v318
    %v356 = vmul.f32 %v230, %v323
    %v357 = vmul.f32 %v235, %v328
    %v358 = vmul.f32 %v238, %v333
    %v359 = vmul.f32 %v243, %v338
    %v360 = vmul.f32 %v246, %v343
    %v361 = vpack.c.bf16 %v346, %v345
    %v362 = vpack.c.bf16 %v348, %v347
    %v363 = vpack.c.bf16 %v350, %v349
    %v364 = vpack.c.bf16 %v352, %v351
    %v365 = vpack.c.bf16 %v354, %v353
    %v366 = vpack.c.bf16 %v356, %v355
    %v367 = vpack.c.bf16 %v358, %v357
    %v368 = vpack.c.bf16 %v360, %v359
    %v371 = vunpack.c.l.b16 %v38
    %v372 = vunpack.c.l.b16 %v39
    %v373 = vpack.c.b16 %v372, %v371
    %375 = vmatprep.subr.bf16.mxu0 0
    %376 = vmatpush1.bf16.xpose.msra.mxu0 %v368
    %377 = vmatprep.subr.bf16.mxu0 0
    %378 = vmatpush1.bf16.xpose.msra.mxu0 %v367
    %379 = vmatprep.subr.bf16.mxu0 0
    %380 = vmatpush1.bf16.xpose.msra.mxu0 %v366
    %381 = vmatprep.subr.bf16.mxu0 0
    %382 = vmatpush1.bf16.xpose.msra.mxu0 %v365
    %383 = vmatprep.subr.bf16.mxu0 0
    %384 = vmatpush1.bf16.xpose.msra.mxu0 %v364
    %385 = vmatprep.subr.bf16.mxu0 0
    %386 = vmatpush1.bf16.xpose.msra.mxu0 %v363
    %387 = vmatprep.subr.bf16.mxu0 0
    %388 = vmatpush1.bf16.xpose.msra.mxu0 %v362
    %389 = vmatprep.subr.bf16.mxu0 0
    %390 = vmatpush1.bf16.xpose.msra.mxu0 %v361
    %391 = vmatprep.subr.bf16.mxu0 0
    %392 = vmatpush2.bf16.xpose.msra.mxu0 0
    %393 = vmatprep.subr.bf16.mxu0 0
    %394 = vmatpush2.bf16.xpose.msra.mxu0 0
    %395 = vmatprep.subr.bf16.mxu0 0
    %396 = vmatpush2.bf16.xpose.msra.mxu0 0
    %397 = vmatprep.subr.bf16.mxu0 0
    %398 = vmatpush2.bf16.xpose.msra.mxu0 0
    %399 = vmatprep.subr.bf16.mxu0 0
    %400 = vmatpush2.bf16.xpose.msra.mxu0 0
    %401 = vmatprep.subr.bf16.mxu0 0
    %402 = vmatpush2.bf16.xpose.msra.mxu0 0
    %403 = vmatprep.subr.bf16.mxu0 0
    %404 = vmatpush2.bf16.xpose.msra.mxu0 0
    %405 = vmatprep.subr.bf16.mxu0 0
    %406 = vmatpush2.bf16.xpose.msra.mxu0 0
    %407 = vmatprep.mubr.bf16.mxu0 0
    %408 = vmatmul.mubr.bf16.gmra.mxu0 %v373
    %v409 = vpop.f32.mrf.mxu0
    %v410 = vadd.f32 0.0, %v409
    %v411 = vpop.f32.mrf.mxu0
    %v412 = vpop.f32.mrf.mxu0
    %v413 = vadd.f32 0.0, %v412
    %v414 = vpop.f32.mrf.mxu0
    %415 = vdwg.mxu0
    %v416 = vmul.f32 %v345, %v345
    %v417 = vmul.f32 %v346, %v346
    %v418 = vmul.f32 %v347, %v347
    %v419 = vmul.f32 %v348, %v348
    %v420 = vmul.f32 %v349, %v349
    %v421 = vmul.f32 %v350, %v350
    %v422 = vmul.f32 %v351, %v351
    %v423 = vmul.f32 %v352, %v352
    %v424 = vmul.f32 %v353, %v353
    %v425 = vmul.f32 %v354, %v354
    %v426 = vmul.f32 %v355, %v355
    %v427 = vmul.f32 %v356, %v356
    %v428 = vmul.f32 %v357, %v357
    %v429 = vmul.f32 %v358, %v358
    %v430 = vmul.f32 %v359, %v359
    %v431 = vmul.f32 %v360, %v360
    %432 = vmatprep.subr.mxu0 0.0
    %433 = vmatpush1.xpose.msra.mxu0 %v431
    %434 = vmatprep.subr.mxu0 0.0
    %435 = vmatpush1.xpose.msra.mxu0 %v430
    %436 = vmatprep.subr.mxu0 0.0
    %437 = vmatpush1.xpose.msra.mxu0 %v429
    %438 = vmatprep.subr.mxu0 0.0
    %439 = vmatpush1.xpose.msra.mxu0 %v428
    %440 = vmatprep.subr.mxu0 0.0
    %441 = vmatpush1.xpose.msra.mxu0 %v427
    %442 = vmatprep.subr.mxu0 0.0
    %443 = vmatpush1.xpose.msra.mxu0 %v426
    %444 = vmatprep.subr.mxu0 0.0
    %445 = vmatpush1.xpose.msra.mxu0 %v425
    %446 = vmatprep.subr.mxu0 0.0
    %447 = vmatpush1.xpose.msra.mxu0 %v424
    %448 = vmatprep.subr.mxu0 0.0
    %449 = vmatpush1.xpose.msra.mxu0 %v423
    %450 = vmatprep.subr.mxu0 0.0
    %451 = vmatpush1.xpose.msra.mxu0 %v422
    %452 = vmatprep.subr.mxu0 0.0
    %453 = vmatpush1.xpose.msra.mxu0 %v421
    %454 = vmatprep.subr.mxu0 0.0
    %455 = vmatpush1.xpose.msra.mxu0 %v420
    %456 = vmatprep.subr.mxu0 0.0
    %457 = vmatpush1.xpose.msra.mxu0 %v419
    %458 = vmatprep.subr.mxu0 0.0
    %459 = vmatpush1.xpose.msra.mxu0 %v418
    %460 = vmatprep.subr.mxu0 0.0
    %461 = vmatpush1.xpose.msra.mxu0 %v417
    %462 = vmatprep.subr.mxu0 0.0
    %463 = vmatpush1.xpose.msra.mxu0 %v416
    %464 = vmatprep.subr.mxu0 0.0
    %465 = vmatpush2.xpose.msra.mxu0 0.0
    %466 = vmatprep.subr.mxu0 0.0
    %467 = vmatpush2.xpose.msra.mxu0 0.0
    %468 = vmatprep.subr.mxu0 0.0
    %469 = vmatpush2.xpose.msra.mxu0 0.0
    %470 = vmatprep.subr.mxu0 0.0
    %471 = vmatpush2.xpose.msra.mxu0 0.0
    %472 = vmatprep.subr.mxu0 0.0
    %473 = vmatpush2.xpose.msra.mxu0 0.0
    %474 = vmatprep.subr.mxu0 0.0
    %475 = vmatpush2.xpose.msra.mxu0 0.0
    %476 = vmatprep.subr.mxu0 0.0
    %477 = vmatpush2.xpose.msra.mxu0 0.0
    %478 = vmatprep.subr.mxu0 0.0
    %479 = vmatpush2.xpose.msra.mxu0 0.0
    %480 = vmatprep.subr.mxu0 0.0
    %481 = vmatpush2.xpose.msra.mxu0 0.0
    %482 = vmatprep.subr.mxu0 0.0
    %483 = vmatpush2.xpose.msra.mxu0 0.0
    %484 = vmatprep.subr.mxu0 0.0
    %485 = vmatpush2.xpose.msra.mxu0 0.0
    %486 = vmatprep.subr.mxu0 0.0
    %487 = vmatpush2.xpose.msra.mxu0 0.0
    %488 = vmatprep.subr.mxu0 0.0
    %489 = vmatpush2.xpose.msra.mxu0 0.0
    %490 = vmatprep.subr.mxu0 0.0
    %491 = vmatpush2.xpose.msra.mxu0 0.0
    %492 = vmatprep.subr.mxu0 0.0
    %493 = vmatpush2.xpose.msra.mxu0 0.0
    %494 = vmatprep.subr.mxu0 0.0
    %495 = vmatpush2.xpose.msra.mxu0 0.0
    %496 = vmatprep.mubr.f32.mxu0 0.0
    %497 = vmatmul.mubr.f32.gmra.mxu0 1.0
    %v498 = vpop.f32.mrf.mxu0
    %v499 = vadd.f32 0.0, %v498
    %v500 = vpop.f32.mrf.mxu0
    %501 = vdwg.mxu0
    %v502 = vld [vmem:[%s2] sm:$0xff]
    %v503 = vld [vmem:[%s2 + $0x8] sm:$0xff]
    %505 = vset.pattern.permute.xlu0 0
    %506 = vperm.xlu0 %505, %v502
    %v507 = vpop.permute.xlu0 %506
    %510 = vset.pattern.permute.xlu0 0
    %511 = vperm.xlu0 %510, %v503
    %v512 = vpop.permute.xlu0 %511
    %v514 = vlaneseq
    %v515 = vshrl.u32 %v514, 7
    %v516 = vsub.s32 0, %v515
    %v517 = vrot.slane %v499, %v516
    %v518 = vmul.f32 %v507, %v517
    %v519 = vmul.f32 %v512, %v517
    %v520 = vmax.f32 %v518, 1e-16
    %v521 = vmax.f32 %v519, 1e-16
    %v522 = vrsqrt.pop %v520
    %v523 = vrsqrt.pop %v521
    %v524 = vmul.f32 %v410, %v522
    %v525 = vmul.f32 %v413, %v523
    %526 = vst [vmem:[#allocation2] sm:$0xff] %v524
    %527 = vst [vmem:[#allocation2 + $0x8] sm:$0xff] %v525
    // Predicated region
    $region22: #{tpu_custom_call.1} parent=1 // pred_check
      _
    $region23: #{tpu_custom_call.1} parent=1 // pred_check_branch
      %529 = sbr.rel (0) target = $region25
    $region24: #{tpu_custom_call.1} parent=1 // pred_region
      %s531 = ssub.s32 256, 256
      %532 = vsyncadd [#allocation3], %s531
      %s533 = sshll.u32 [#allocation2], 4
      %s534 = int_to_ptr.vmem [resolvable:$true] %s533
      %539 = dma.vmem_to_hbm [thread:$0]  %s534, 256, %s5, [#allocation3], 128, 128, 8
    $region25: #{tpu_custom_call.1} parent=1 // pred_fallthru
      _
    // Predicated region
    $region26: #{tpu_custom_call.1} parent=1 // pred_check
      _
    $region27: #{tpu_custom_call.1} parent=1 // pred_check_branch
      %541 = sbr.rel (0) target = $region29
    $region28: #{tpu_custom_call.1} parent=1 // pred_region
      %542 = dma.done [#allocation3], 256
    $region29: #{tpu_custom_call.1} parent=1 // pred_fallthru
      _
    %543 = vsyncpa [#allocation3], 1

</llo_original>
